<compile_context>
chip_gen: v7x
topology: tpu7x:2x2x1
jax: 0.10.0
libtpu: 0.0.40
codegen_flags: <defaults>
</compile_context>

<pallas_src>
import jax
import jax.numpy as jnp
from jax import lax
from jax.experimental import pallas as pl
from jax.experimental.pallas import tpu as pltpu


def _round_up(x, m):
    return ((x + m - 1) // m) * m


def linear_kernel(x_ref, w_ref, b_ref, o_ref):
    """One (tm x tn) output tile: y = x @ W.T + b with full-K contraction."""
    # x_ref: (tm, K)   w_ref: (tn, K)  (PyTorch (out, in) layout)   b_ref: (1, tn)
    acc = lax.dot_general(
        x_ref[...], w_ref[...],
        dimension_numbers=(((1,), (1,)), ((), ())),   # x @ w.T on the MXU
        preferred_element_type=jnp.float32,
    )
    o_ref[...] = (acc + b_ref[...]).astype(o_ref.dtype)


def resnet_top_no_softmax(x, weight, bias):
    """Pallas implementation of ResNetTopNoSoftmax.forward (nn.Linear).

    x:      (B, in_features)            float32
    weight: (out_features, in_features) -- PyTorch nn.Linear layout (NOT transposed)
    bias:   (out_features,)
    returns (B, out_features)
    """
    M, K = x.shape
    N, Kw = weight.shape
    assert K == Kw, "in_features mismatch"

    # Lane/sublane-friendly padded problem sizes.
    Mp = _round_up(M, 8)
    Np = _round_up(N, 256)            # >= 2 lane-dense (128) blocks along N

    tm = min(Mp, 128)                 # whole (small) batch per tile; 128 cap is v5e-safe
    Mp = _round_up(Mp, tm)
    tn = min(Np // 2, 512)            # >= 2 parallel N blocks (v7x megacore), multiple of 128
    Np = _round_up(Np, tn)

    # Zero-pad (under jit this fuses; padded rows/cols are sliced off below).
    x_p = x if Mp == M else jnp.pad(x, ((0, Mp - M), (0, 0)))
    w_p = weight if Np == N else jnp.pad(weight, ((0, Np - N), (0, 0)))
    b_p = (bias if Np == N else jnp.pad(bias, (0, Np - N))).reshape(1, Np)

    out = pl.pallas_call(
        linear_kernel,
        out_shape=jax.ShapeDtypeStruct((Mp, Np), x.dtype),
        grid=(Mp // tm, Np // tn),
        in_specs=[
            pl.BlockSpec((tm, K), lambda i, j: (i, 0)),   # x rows, full K
            pl.BlockSpec((tn, K), lambda i, j: (j, 0)),   # weight rows, (out, in) layout
            pl.BlockSpec((1, tn), lambda i, j: (0, j)),   # bias slice
        ],
        out_specs=pl.BlockSpec((tm, tn), lambda i, j: (i, j)),
        compiler_params=pltpu.CompilerParams(
            dimension_semantics=("parallel", "parallel"),
        ),
    )(x_p, w_p, b_p)

    return out[:M, :N]


if __name__ == "__main__":
    # Real resnet18 fc geometry (512 -> 1000) at a small batch; N=1000 exercises
    # the lane padding path (1000 -> 1024, two 512-wide parallel blocks).
    B, IN_FEATURES, OUT_FEATURES = 8, 512, 1000

    key = jax.random.PRNGKey(0)
    kx, kw, kb = jax.random.split(key, 3)

    x = jax.random.normal(kx, (B, IN_FEATURES), dtype=jnp.float32)

    # Deterministic nn.Linear-style init: U(-1/sqrt(in), 1/sqrt(in))
    bound = 1.0 / (IN_FEATURES ** 0.5)
    weight = jax.random.uniform(
        kw, (OUT_FEATURES, IN_FEATURES), minval=-bound, maxval=bound,
        dtype=jnp.float32)
    bias = jax.random.uniform(
        kb, (OUT_FEATURES,), minval=-bound, maxval=bound, dtype=jnp.float32)

    fwd = jax.jit(resnet_top_no_softmax)
    out = jax.block_until_ready(fwd(x, weight, bias))

    # Reference check (plain JAX) — same semantics as PyTorch nn.Linear.
    ref = x @ weight.T + bias
    assert out.shape == (B, OUT_FEATURES)
    assert jnp.allclose(out, ref, atol=1e-4, rtol=1e-4)

    print("KERNEL_OK")
</pallas_src>

<mosaic_0001>
module attributes {stable_mosaic.version = 11 : i64} {
  func.func @linear_kernel(%arg0: i32, %arg1: i32, %arg2: memref<8x512xf32, #tpu.memory_space<vmem>>, %arg3: memref<512x512xf32, #tpu.memory_space<vmem>>, %arg4: memref<1x512xf32, #tpu.memory_space<vmem>>, %arg5: memref<8x512xf32, #tpu.memory_space<vmem>>) attributes {dimension_semantics = [#tpu.dimension_semantics<parallel>, #tpu.dimension_semantics<parallel>], iteration_bounds = array<i64: 1, 2>, scalar_prefetch = 0 : i64, scratch_operands = 0 : i64, tpu.core_type = #tpu.core_type<tc>, window_params = [{transform_indices = @transform_0, window_bounds = array<i64: 8, 512>}, {transform_indices = @transform_1, window_bounds = array<i64: 512, 512>}, {transform_indices = @transform_2, window_bounds = array<i64: 1, 512>}, {transform_indices = @transform_3, window_bounds = array<i64: 8, 512>}]} {
    %c0 = arith.constant 0 : index
    %c0_0 = arith.constant 0 : index
    %0 = vector.load %arg2[%c0, %c0_0] : memref<8x512xf32, #tpu.memory_space<vmem>>, vector<8x512xf32>
    %c0_1 = arith.constant 0 : index
    %c0_2 = arith.constant 0 : index
    %1 = vector.load %arg3[%c0_1, %c0_2] : memref<512x512xf32, #tpu.memory_space<vmem>>, vector<512x512xf32>
    %cst = arith.constant dense<0.000000e+00> : vector<8x512xf32>
    %2 = tpu.matmul %0, %1, %cst {dimension_numbers = #tpu.dot_dimension_numbers<[1], [1], [0], [0], [0, 0, 1, 0], [], []>} : vector<8x512xf32>, vector<512x512xf32>, vector<8x512xf32> -> vector<8x512xf32>
    %c0_3 = arith.constant 0 : index
    %c0_4 = arith.constant 0 : index
    %3 = vector.load %arg4[%c0_3, %c0_4] : memref<1x512xf32, #tpu.memory_space<vmem>>, vector<1x512xf32>
    %4 = vector.broadcast %3 : vector<1x512xf32> to vector<8x512xf32>
    %5 = arith.addf %2, %4 : vector<8x512xf32>
    %c0_5 = arith.constant 0 : index
    %c0_6 = arith.constant 0 : index
    %6 = vector.load %arg5[%c0_5, %c0_6] : memref<8x512xf32, #tpu.memory_space<vmem>>, vector<8x512xf32>
    tpu.vector_store %arg5[%c0_5, %c0_6], %5 {strides = array<i32>} : memref<8x512xf32, #tpu.memory_space<vmem>>, vector<8x512xf32>,
    return
  }
  func.func @transform_0(%arg0: i32, %arg1: i32) -> (i32, i32) {
    %c0_i32 = arith.constant 0 : i32
    %c0_i32_0 = arith.constant 0 : i32
    return %arg0, %c0_i32 : i32, i32
  }
  func.func @transform_1(%arg0: i32, %arg1: i32) -> (i32, i32) {
    %c0_i32 = arith.constant 0 : i32
    %c0_i32_0 = arith.constant 0 : i32
    return %arg1, %c0_i32 : i32, i32
  }
  func.func @transform_2(%arg0: i32, %arg1: i32) -> (i32, i32) {
    %c0_i32 = arith.constant 0 : i32
    %c0_i32_0 = arith.constant 0 : i32
    return %c0_i32, %arg1 : i32, i32
  }
  func.func @transform_3(%arg0: i32, %arg1: i32) -> (i32, i32) {
    %c0_i32 = arith.constant 0 : i32
    return %arg0, %arg1 : i32, i32
  }
}

</mosaic_0001>

<llo_original>
// kernel: resnet_top_no_softmax.1
$region0: #{resnet_top_no_softmax.1}
  #allocation0 [shape = 'u32[]', space=smem, size = 0x4, offset = 0x4, fixed_abs, tag = 'smem constant byte address 0x4 - core index']
  #allocation1 [shape = 'u32[144,128]{1,0:T(1,128)}', space=vmem, size = 0x12000, scoped, tag = 'internal scratch']
  %s0 = inlined_call_operand.vmem [shape: f32[8,512], index: 0, kind: input, shape index: {}]
  %s1 = inlined_call_operand.vmem [shape: f32[1024,512], index: 1, kind: input, shape index: {}]
  %s2 = inlined_call_operand.vmem [shape: f32[1,1024], index: 2, kind: input, shape index: {}]
  %s3 = inlined_call_operand.hbm [shape: f32[8,1024], index: 3, kind: output, shape index: {}]
  %s4 = sld [smem:[#allocation0]]
  $region45: #{resnet_top_no_softmax.1} parent=0
    _
  %s6 = ssub.s32 1, %s4
  %s7 = scalar_select 0, %s6, %s4
  $region1: #{resnet_top_no_softmax.1} parent=0
    #allocation2 [shape = 'u8[32768]{0}', space=vmem, size = 0x8000, scoped, tag = 'output window, operand 0']
    #allocation3 [shape = 's32[2]{0}', space=sflag, size = 0x8, scoped, tag = 'scoped memory for resnet_top_no_softmax.1']
    %8 = vsyncpa [#allocation3], 0
    %s9 = scalar_lea.sflag [#allocation3], 1
    %10 = vsyncpa %s9, 0
    loop: start=0, step=1, limit=4
    $region2: #{resnet_top_no_softmax.1} parent=1 // loop_pre_header
      _
    $region3: #{resnet_top_no_softmax.1} parent=1 // loop_header
      %s12 = sphi 0, %s16
      %p13 = scmp.ge.s32.totalorder %s12, 4
      %s19 = sphi 0, %s31
      %s20 = sphi 0, %s27
      %s21 = sphi 0, %s19
      %s22 = sphi 0, %s20
      %s23 = sphi 0, %s21
      %s24 = sphi 0, %s22
      %s34 = sphi 0, %s36
      %s37 = sphi 0, %s34
      %s38 = sphi 0, %s37
      %s54 = sphi 0, %s38
      %s60 = sphi 0, %s62
      %s63 = sphi 0, %s60
      %s64 = sphi 0, %s63
      %s80 = sphi 0, %s64
      %s86 = sphi 0, %s88
      %s89 = sphi 0, %s86
      %s90 = sphi 0, %s89
      %s106 = sphi 0, %s90
      %s114 = sphi 0, %s116
      %s117 = sphi 0, %s114
      %s118 = sphi 0, %s117
      %s134 = sphi 0, %s118
    $region4: #{resnet_top_no_softmax.1} parent=1 // loop_header_branch
      %15 = sbr.rel (%p13) target = $region8
    $region5: #{resnet_top_no_softmax.1} parent=1 // loop_body
      %s17 = ssub.s32 %s12, 1
      %s18 = ssub.s32 %s12, 2
      %s25 = sadd.s32 1, %s20
      %p26 = scmp.ge.s32.totalorder %s25, 2
      %s27 = scalar_select %p26, 0, %s25
      %s28 = sadd.s32 1, %s19
      %s29 = scalar_select %p26, %s28, %s19
      %p30 = scmp.ge.s32.totalorder %s29, 1
      %s31 = scalar_select %p30, 0, %s29
      %s32 = ssub.s32 %s19, %s31
      %p33 = scmp.eq.s32.totalorder %s32, 0
      %s35 = sadd.s32 %s34, 1
      %s36 = scalar_select %p33, %s34, %s35
      %p39 = pneg %p33
      %p40 = scmp.eq.s32.totalorder %s12, 1
      %p41 = por %p39, %p40
      %p42 = scmp.ne.s32.totalorder %s34, %s37
      %p43 = scmp.eq.s32.totalorder %s12, 0
      %p44 = por %p42, %p43
      %p45 = scmp.ne.s32.totalorder %s34, %s37
      %p46 = scmp.eq.s32.totalorder %s17, 1
      %p47 = por %p45, %p46
      %p48 = scmp.ne.s32.totalorder %s37, %s38
      %p49 = scmp.eq.s32.totalorder %s17, 0
      %p50 = por %p48, %p49
      %p51 = scmp.ne.s32.totalorder %s37, %s38
      %p52 = scmp.eq.s32.totalorder %s18, 1
      %p53 = por %p51, %p52
      %p55 = scmp.ne.s32.totalorder %s38, %s54
      %p56 = scmp.eq.s32.totalorder %s18, 0
      %p57 = por %p55, %p56
      %s58 = ssub.s32 %s20, %s27
      %p59 = scmp.eq.s32.totalorder %s58, 0
      %s61 = sadd.s32 %s60, 1
      %s62 = scalar_select %p59, %s60, %s61
      %p65 = pneg %p59
      %p66 = scmp.eq.s32.totalorder %s12, 1
      %p67 = por %p65, %p66
      %p68 = scmp.ne.s32.totalorder %s60, %s63
      %p69 = scmp.eq.s32.totalorder %s12, 0
      %p70 = por %p68, %p69
      %p71 = scmp.ne.s32.totalorder %s60, %s63
      %p72 = scmp.eq.s32.totalorder %s17, 1
      %p73 = por %p71, %p72
      %p74 = scmp.ne.s32.totalorder %s63, %s64
      %p75 = scmp.eq.s32.totalorder %s17, 0
      %p76 = por %p74, %p75
      %p77 = scmp.ne.s32.totalorder %s63, %s64
      %p78 = scmp.eq.s32.totalorder %s18, 1
      %p79 = por %p77, %p78
      %p81 = scmp.ne.s32.totalorder %s64, %s80
      %p82 = scmp.eq.s32.totalorder %s18, 0
      %p83 = por %p81, %p82
      %s84 = ssub.s32 %s20, %s27
      %p85 = scmp.eq.s32.totalorder %s84, 0
      %s87 = sadd.s32 %s86, 1
      %s88 = scalar_select %p85, %s86, %s87
      %p91 = pneg %p85
      %p92 = scmp.eq.s32.totalorder %s12, 1
      %p93 = por %p91, %p92
      %p94 = scmp.ne.s32.totalorder %s86, %s89
      %p95 = scmp.eq.s32.totalorder %s12, 0
      %p96 = por %p94, %p95
      %p97 = scmp.ne.s32.totalorder %s86, %s89
      %p98 = scmp.eq.s32.totalorder %s17, 1
      %p99 = por %p97, %p98
      %p100 = scmp.ne.s32.totalorder %s89, %s90
      %p101 = scmp.eq.s32.totalorder %s17, 0
      %p102 = por %p100, %p101
      %p103 = scmp.ne.s32.totalorder %s89, %s90
      %p104 = scmp.eq.s32.totalorder %s18, 1
      %p105 = por %p103, %p104
      %p107 = scmp.ne.s32.totalorder %s90, %s106
      %p108 = scmp.eq.s32.totalorder %s18, 0
      %p109 = por %p107, %p108
      %s110 = ssub.s32 %s19, %s31
      %s111 = ssub.s32 %s20, %s27
      %s112 = sor.u32 %s110, %s111
      %p113 = scmp.eq.s32.totalorder %s112, 0
      %s115 = sadd.s32 %s114, 1
      %s116 = scalar_select %p113, %s114, %s115
      %p119 = pneg %p113
      %p120 = scmp.eq.s32.totalorder %s12, 1
      %p121 = por %p119, %p120
      %p122 = scmp.ne.s32.totalorder %s114, %s117
      %p123 = scmp.eq.s32.totalorder %s12, 0
      %p124 = por %p122, %p123
      %p125 = scmp.ne.s32.totalorder %s114, %s117
      %p126 = scmp.eq.s32.totalorder %s17, 1
      %p127 = por %p125, %p126
      %p128 = scmp.ne.s32.totalorder %s117, %s118
      %p129 = scmp.eq.s32.totalorder %s17, 0
      %p130 = por %p128, %p129
      %p131 = scmp.ne.s32.totalorder %s117, %s118
      %p132 = scmp.eq.s32.totalorder %s18, 1
      %p133 = por %p131, %p132
      %p135 = scmp.ne.s32.totalorder %s118, %s134
      %p136 = scmp.eq.s32.totalorder %s18, 0
      %p137 = por %p135, %p136
      %p138 = scmp.le.s32.totalorder 1, %s12
      %p139 = scmp.lt.s32.totalorder %s12, 3
      %p140 = pnand %p138, %p139
      %p141 = pneg %p140
      // Predicated region
      $region9: #{resnet_top_no_softmax.1} parent=5 // pred_check
        _
      $region10: #{resnet_top_no_softmax.1} parent=5 // pred_check_branch
        %143 = sbr.rel (%p140) target = $region12
      $region11: #{resnet_top_no_softmax.1} parent=5 // pred_region
        %s144 = ssub.s32 %s12, 1
        // Predicated region
        $region13: #{resnet_top_no_softmax.1} parent=11 // pred_check
          %p145 = pneg %p50
        $region14: #{resnet_top_no_softmax.1} parent=11 // pred_check_branch
          %147 = sbr.rel (%p145) target = $region16
        $region15: #{resnet_top_no_softmax.1} parent=11 // pred_region
          %p148 = scmp.lt.s32.totalorder %s21, 0
          %s149 = scalar_select %p148, %s21, 0
          %s150 = smul.addr %s149, 4
          %s151 = smul.addr %s150, 8
          %s152 = scalar_lea.vmem %s0, %s151
        $region16: #{resnet_top_no_softmax.1} parent=11 // pred_fallthru
          _
      $region12: #{resnet_top_no_softmax.1} parent=5 // pred_fallthru
        _
      %p153 = scmp.lt.s32.totalorder %s12, 2
      // Predicated region
      $region17: #{resnet_top_no_softmax.1} parent=5 // pred_check
        %p154 = pneg %p153
      $region18: #{resnet_top_no_softmax.1} parent=5 // pred_check_branch
        %156 = sbr.rel (%p154) target = $region20
      $region19: #{resnet_top_no_softmax.1} parent=5 // pred_region
        // Predicated region
        $region21: #{resnet_top_no_softmax.1} parent=19 // pred_check
          %p157 = pneg %p70
        $region22: #{resnet_top_no_softmax.1} parent=19 // pred_check_branch
          %159 = sbr.rel (%p157) target = $region24
        $region23: #{resnet_top_no_softmax.1} parent=19 // pred_region
          %s160 = smul.u32 64, %s20
          %p161 = scmp.lt.s32.totalorder %s160, 127
          %s162 = scalar_select %p161, %s160, 127
          %s163 = smul.addr %s162, 4
          %s164 = smul.addr %s163, 8
          %s165 = scalar_lea.vmem %s1, %s164
          %s166 = smul.u32 64, %s20
        $region24: #{resnet_top_no_softmax.1} parent=19 // pred_fallthru
          _
        // Predicated region
        $region25: #{resnet_top_no_softmax.1} parent=19 // pred_check
          %p167 = pneg %p96
        $region26: #{resnet_top_no_softmax.1} parent=19 // pred_check_branch
          %169 = sbr.rel (%p167) target = $region28
        $region27: #{resnet_top_no_softmax.1} parent=19 // pred_region
          %s170 = smul.u32 4, %s20
          %p171 = scmp.lt.s32.totalorder %s170, 7
          %s172 = scalar_select %p171, %s170, 7
          %s173 = scalar_lea.vmem %s2, %s172
          %s174 = smul.u32 4, %s20
        $region28: #{resnet_top_no_softmax.1} parent=19 // pred_fallthru
          _
      $region20: #{resnet_top_no_softmax.1} parent=5 // pred_fallthru
        _
      %p175 = scmp.le.s32.totalorder 1, %s12
      %p176 = scmp.lt.s32.totalorder %s12, 3
      %p177 = pnand %p175, %p176
      %p178 = pneg %p177
      // Predicated region
      $region29: #{resnet_top_no_softmax.1} parent=5 // pred_check
        _
      $region30: #{resnet_top_no_softmax.1} parent=5 // pred_check_branch
        %180 = sbr.rel (%p177) target = $region32
      $region31: #{resnet_top_no_softmax.1} parent=5 // pred_region
        %s181 = ssub.s32 %s12, 1
        %p182 = scmp.lt.s32.totalorder %s21, 0
        %s183 = scalar_select %p182, %s21, 0
        %s184 = smul.addr %s183, 4
        %s185 = smul.addr %s184, 8
        %s186 = scalar_lea.vmem %s0, %s185
        %p187 = pneg %p50
        %p188 = pneg %p47
        %s189 = smul.u32 64, %s22
        %p190 = scmp.lt.s32.totalorder %s189, 127
        %s191 = scalar_select %p190, %s189, 127
        %s192 = smul.addr %s191, 4
        %s193 = smul.addr %s192, 8
        %s194 = scalar_lea.vmem %s1, %s193
        %p195 = pneg %p76
        %p196 = pneg %p73
        %s197 = smul.u32 4, %s22
        %p198 = scmp.lt.s32.totalorder %s197, 7
        %s199 = scalar_select %p198, %s197, 7
        %s200 = scalar_lea.vmem %s2, %s199
        %p201 = pneg %p102
        %p202 = pneg %p99
        %p203 = pneg %p130
        %p204 = pneg %p127
        %s205 = sand.u32 %s117, 1
        %s206 = scalar_lea.sflag [#allocation3], %s205
        %s207 = sand.u32 %s117, 1
        %s208 = smul.addr %s207, 32
        %s209 = scalar_lea.vmem [#allocation2], %s208
        %p210 = scmp.lt.s32.totalorder %s21, 0
        %s211 = scalar_select %p210, %s21, 0
        %s212 = smul.addr %s211, 4
        %s213 = smul.addr %s212, 8
        %s214 = scalar_lea.vmem %s0, %s213
        %s215 = smul.u32 64, %s22
        %p216 = scmp.lt.s32.totalorder %s215, 127
        %s217 = scalar_select %p216, %s215, 127
        %s218 = smul.addr %s217, 4
        %s219 = smul.addr %s218, 8
        %s220 = scalar_lea.vmem %s1, %s219
        %s221 = smul.u32 64, %s22
        %s222 = smul.u32 4, %s22
        %p223 = scmp.lt.s32.totalorder %s222, 7
        %s224 = scalar_select %p223, %s222, 7
        %s225 = scalar_lea.vmem %s2, %s224
        %s226 = smul.u32 4, %s22
        %s227 = smul.u32 4, %s22
        %v228 = vld [vmem:[%s214] sm:$0xff]
        %v229 = vld [vmem:[%s214 + $0x8] sm:$0xff]
        %v230 = vld [vmem:[%s214 + $0x10] sm:$0xff]
        %v231 = vld [vmem:[%s214 + $0x18] sm:$0xff]
        %v232 = vld [vmem:[%s220] sm:$0xff]
        %v233 = vld [vmem:[%s220 + $0x8] sm:$0xff]
        %v234 = vld [vmem:[%s220 + $0x10] sm:$0xff]
        %v235 = vld [vmem:[%s220 + $0x18] sm:$0xff]
        %v236 = vld [vmem:[%s220 + $0x20] sm:$0xff]
        %v237 = vld [vmem:[%s220 + $0x28] sm:$0xff]
        %v238 = vld [vmem:[%s220 + $0x30] sm:$0xff]
        %v239 = vld [vmem:[%s220 + $0x38] sm:$0xff]
        %v240 = vld [vmem:[%s220 + $0x40] sm:$0xff]
        %v241 = vld [vmem:[%s220 + $0x48] sm:$0xff]
        %v242 = vld [vmem:[%s220 + $0x50] sm:$0xff]
        %v243 = vld [vmem:[%s220 + $0x58] sm:$0xff]
        %v244 = vld [vmem:[%s220 + $0x60] sm:$0xff]
        %v245 = vld [vmem:[%s220 + $0x68] sm:$0xff]
        %v246 = vld [vmem:[%s220 + $0x70] sm:$0xff]
        %v247 = vld [vmem:[%s220 + $0x78] sm:$0xff]
        %v248 = vld [vmem:[%s220 + $0x80] sm:$0xff]
        %v249 = vld [vmem:[%s220 + $0x88] sm:$0xff]
        %v250 = vld [vmem:[%s220 + $0x90] sm:$0xff]
        %v251 = vld [vmem:[%s220 + $0x98] sm:$0xff]
        %v252 = vld [vmem:[%s220 + $0xa0] sm:$0xff]
        %v253 = vld [vmem:[%s220 + $0xa8] sm:$0xff]
        %v254 = vld [vmem:[%s220 + $0xb0] sm:$0xff]
        %v255 = vld [vmem:[%s220 + $0xb8] sm:$0xff]
        %v256 = vld [vmem:[%s220 + $0xc0] sm:$0xff]
        %v257 = vld [vmem:[%s220 + $0xc8] sm:$0xff]
        %v258 = vld [vmem:[%s220 + $0xd0] sm:$0xff]
        %v259 = vld [vmem:[%s220 + $0xd8] sm:$0xff]
        %v260 = vld [vmem:[%s220 + $0xe0] sm:$0xff]
        %v261 = vld [vmem:[%s220 + $0xe8] sm:$0xff]
        %v262 = vld [vmem:[%s220 + $0xf0] sm:$0xff]
        %v263 = vld [vmem:[%s220 + $0xf8] sm:$0xff]
        %v264 = vld [vmem:[%s220 + $0x100] sm:$0xff]
        %v265 = vld [vmem:[%s220 + $0x108] sm:$0xff]
        %v266 = vld [vmem:[%s220 + $0x110] sm:$0xff]
        %v267 = vld [vmem:[%s220 + $0x118] sm:$0xff]
        %v268 = vld [vmem:[%s220 + $0x120] sm:$0xff]
        %v269 = vld [vmem:[%s220 + $0x128] sm:$0xff]
        %v270 = vld [vmem:[%s220 + $0x130] sm:$0xff]
        %v271 = vld [vmem:[%s220 + $0x138] sm:$0xff]
        %v272 = vld [vmem:[%s220 + $0x140] sm:$0xff]
        %v273 = vld [vmem:[%s220 + $0x148] sm:$0xff]
        %v274 = vld [vmem:[%s220 + $0x150] sm:$0xff]
        %v275 = vld [vmem:[%s220 + $0x158] sm:$0xff]
        %v276 = vld [vmem:[%s220 + $0x160] sm:$0xff]
        %v277 = vld [vmem:[%s220 + $0x168] sm:$0xff]
        %v278 = vld [vmem:[%s220 + $0x170] sm:$0xff]
        %v279 = vld [vmem:[%s220 + $0x178] sm:$0xff]
        %v280 = vld [vmem:[%s220 + $0x180] sm:$0xff]
        %v281 = vld [vmem:[%s220 + $0x188] sm:$0xff]
        %v282 = vld [vmem:[%s220 + $0x190] sm:$0xff]
        %v283 = vld [vmem:[%s220 + $0x198] sm:$0xff]
        %v284 = vld [vmem:[%s220 + $0x1a0] sm:$0xff]
        %v285 = vld [vmem:[%s220 + $0x1a8] sm:$0xff]
        %v286 = vld [vmem:[%s220 + $0x1b0] sm:$0xff]
        %v287 = vld [vmem:[%s220 + $0x1b8] sm:$0xff]
        %v288 = vld [vmem:[%s220 + $0x1c0] sm:$0xff]
        %v289 = vld [vmem:[%s220 + $0x1c8] sm:$0xff]
        %v290 = vld [vmem:[%s220 + $0x1d0] sm:$0xff]
        %v291 = vld [vmem:[%s220 + $0x1d8] sm:$0xff]
        %v292 = vld [vmem:[%s220 + $0x1e0] sm:$0xff]
        %v293 = vld [vmem:[%s220 + $0x1e8] sm:$0xff]
        %v294 = vld [vmem:[%s220 + $0x1f0] sm:$0xff]
        %v295 = vld [vmem:[%s220 + $0x1f8] sm:$0xff]
        %v296 = vld [vmem:[%s220 + $0x200] sm:$0xff]
        %v297 = vld [vmem:[%s220 + $0x208] sm:$0xff]
        %v298 = vld [vmem:[%s220 + $0x210] sm:$0xff]
        %v299 = vld [vmem:[%s220 + $0x218] sm:$0xff]
        %v300 = vld [vmem:[%s220 + $0x220] sm:$0xff]
        %v301 = vld [vmem:[%s220 + $0x228] sm:$0xff]
        %v302 = vld [vmem:[%s220 + $0x230] sm:$0xff]
        %v303 = vld [vmem:[%s220 + $0x238] sm:$0xff]
        %v304 = vld [vmem:[%s220 + $0x240] sm:$0xff]
        %v305 = vld [vmem:[%s220 + $0x248] sm:$0xff]
        %v306 = vld [vmem:[%s220 + $0x250] sm:$0xff]
        %v307 = vld [vmem:[%s220 + $0x258] sm:$0xff]
        %v308 = vld [vmem:[%s220 + $0x260] sm:$0xff]
        %v309 = vld [vmem:[%s220 + $0x268] sm:$0xff]
        %v310 = vld [vmem:[%s220 + $0x270] sm:$0xff]
        %v311 = vld [vmem:[%s220 + $0x278] sm:$0xff]
        %v312 = vld [vmem:[%s220 + $0x280] sm:$0xff]
        %v313 = vld [vmem:[%s220 + $0x288] sm:$0xff]
        %v314 = vld [vmem:[%s220 + $0x290] sm:$0xff]
        %v315 = vld [vmem:[%s220 + $0x298] sm:$0xff]
        %v316 = vld [vmem:[%s220 + $0x2a0] sm:$0xff]
        %v317 = vld [vmem:[%s220 + $0x2a8] sm:$0xff]
        %v318 = vld [vmem:[%s220 + $0x2b0] sm:$0xff]
        %v319 = vld [vmem:[%s220 + $0x2b8] sm:$0xff]
        %v320 = vld [vmem:[%s220 + $0x2c0] sm:$0xff]
        %v321 = vld [vmem:[%s220 + $0x2c8] sm:$0xff]
        %v322 = vld [vmem:[%s220 + $0x2d0] sm:$0xff]
        %v323 = vld [vmem:[%s220 + $0x2d8] sm:$0xff]
        %v324 = vld [vmem:[%s220 + $0x2e0] sm:$0xff]
        %v325 = vld [vmem:[%s220 + $0x2e8] sm:$0xff]
        %v326 = vld [vmem:[%s220 + $0x2f0] sm:$0xff]
        %v327 = vld [vmem:[%s220 + $0x2f8] sm:$0xff]
        %v328 = vld [vmem:[%s220 + $0x300] sm:$0xff]
        %v329 = vld [vmem:[%s220 + $0x308] sm:$0xff]
        %v330 = vld [vmem:[%s220 + $0x310] sm:$0xff]
        %v331 = vld [vmem:[%s220 + $0x318] sm:$0xff]
        %v332 = vld [vmem:[%s220 + $0x320] sm:$0xff]
        %v333 = vld [vmem:[%s220 + $0x328] sm:$0xff]
        %v334 = vld [vmem:[%s220 + $0x330] sm:$0xff]
        %v335 = vld [vmem:[%s220 + $0x338] sm:$0xff]
        %v336 = vld [vmem:[%s220 + $0x340] sm:$0xff]
        %v337 = vld [vmem:[%s220 + $0x348] sm:$0xff]
        %v338 = vld [vmem:[%s220 + $0x350] sm:$0xff]
        %v339 = vld [vmem:[%s220 + $0x358] sm:$0xff]
        %v340 = vld [vmem:[%s220 + $0x360] sm:$0xff]
        %v341 = vld [vmem:[%s220 + $0x368] sm:$0xff]
        %v342 = vld [vmem:[%s220 + $0x370] sm:$0xff]
        %v343 = vld [vmem:[%s220 + $0x378] sm:$0xff]
        %v344 = vld [vmem:[%s220 + $0x380] sm:$0xff]
        %v345 = vld [vmem:[%s220 + $0x388] sm:$0xff]
        %v346 = vld [vmem:[%s220 + $0x390] sm:$0xff]
        %v347 = vld [vmem:[%s220 + $0x398] sm:$0xff]
        %v348 = vld [vmem:[%s220 + $0x3a0] sm:$0xff]
        %v349 = vld [vmem:[%s220 + $0x3a8] sm:$0xff]
        %v350 = vld [vmem:[%s220 + $0x3b0] sm:$0xff]
        %v351 = vld [vmem:[%s220 + $0x3b8] sm:$0xff]
        %v352 = vld [vmem:[%s220 + $0x3c0] sm:$0xff]
        %v353 = vld [vmem:[%s220 + $0x3c8] sm:$0xff]
        %v354 = vld [vmem:[%s220 + $0x3d0] sm:$0xff]
        %v355 = vld [vmem:[%s220 + $0x3d8] sm:$0xff]
        %v356 = vld [vmem:[%s220 + $0x3e0] sm:$0xff]
        %v357 = vld [vmem:[%s220 + $0x3e8] sm:$0xff]
        %v358 = vld [vmem:[%s220 + $0x3f0] sm:$0xff]
        %v359 = vld [vmem:[%s220 + $0x3f8] sm:$0xff]
        %v360 = vld [vmem:[%s220 + $0x400] sm:$0xff]
        %v361 = vld [vmem:[%s220 + $0x408] sm:$0xff]
        %v362 = vld [vmem:[%s220 + $0x410] sm:$0xff]
        %v363 = vld [vmem:[%s220 + $0x418] sm:$0xff]
        %v364 = vld [vmem:[%s220 + $0x420] sm:$0xff]
        %v365 = vld [vmem:[%s220 + $0x428] sm:$0xff]
        %v366 = vld [vmem:[%s220 + $0x430] sm:$0xff]
        %v367 = vld [vmem:[%s220 + $0x438] sm:$0xff]
        %v368 = vld [vmem:[%s220 + $0x440] sm:$0xff]
        %v369 = vld [vmem:[%s220 + $0x448] sm:$0xff]
        %v370 = vld [vmem:[%s220 + $0x450] sm:$0xff]
        %v371 = vld [vmem:[%s220 + $0x458] sm:$0xff]
        %v372 = vld [vmem:[%s220 + $0x460] sm:$0xff]
        %v373 = vld [vmem:[%s220 + $0x468] sm:$0xff]
        %v374 = vld [vmem:[%s220 + $0x470] sm:$0xff]
        %v375 = vld [vmem:[%s220 + $0x478] sm:$0xff]
        %v376 = vld [vmem:[%s220 + $0x480] sm:$0xff]
        %v377 = vld [vmem:[%s220 + $0x488] sm:$0xff]
        %v378 = vld [vmem:[%s220 + $0x490] sm:$0xff]
        %v379 = vld [vmem:[%s220 + $0x498] sm:$0xff]
        %v380 = vld [vmem:[%s220 + $0x4a0] sm:$0xff]
        %v381 = vld [vmem:[%s220 + $0x4a8] sm:$0xff]
        %v382 = vld [vmem:[%s220 + $0x4b0] sm:$0xff]
        %v383 = vld [vmem:[%s220 + $0x4b8] sm:$0xff]
        %v384 = vld [vmem:[%s220 + $0x4c0] sm:$0xff]
        %v385 = vld [vmem:[%s220 + $0x4c8] sm:$0xff]
        %v386 = vld [vmem:[%s220 + $0x4d0] sm:$0xff]
        %v387 = vld [vmem:[%s220 + $0x4d8] sm:$0xff]
        %v388 = vld [vmem:[%s220 + $0x4e0] sm:$0xff]
        %v389 = vld [vmem:[%s220 + $0x4e8] sm:$0xff]
        %v390 = vld [vmem:[%s220 + $0x4f0] sm:$0xff]
        %v391 = vld [vmem:[%s220 + $0x4f8] sm:$0xff]
        %v392 = vld [vmem:[%s220 + $0x500] sm:$0xff]
        %v393 = vld [vmem:[%s220 + $0x508] sm:$0xff]
        %v394 = vld [vmem:[%s220 + $0x510] sm:$0xff]
        %v395 = vld [vmem:[%s220 + $0x518] sm:$0xff]
        %v396 = vld [vmem:[%s220 + $0x520] sm:$0xff]
        %v397 = vld [vmem:[%s220 + $0x528] sm:$0xff]
        %v398 = vld [vmem:[%s220 + $0x530] sm:$0xff]
        %v399 = vld [vmem:[%s220 + $0x538] sm:$0xff]
        %v400 = vld [vmem:[%s220 + $0x540] sm:$0xff]
        %v401 = vld [vmem:[%s220 + $0x548] sm:$0xff]
        %v402 = vld [vmem:[%s220 + $0x550] sm:$0xff]
        %v403 = vld [vmem:[%s220 + $0x558] sm:$0xff]
        %v404 = vld [vmem:[%s220 + $0x560] sm:$0xff]
        %v405 = vld [vmem:[%s220 + $0x568] sm:$0xff]
        %v406 = vld [vmem:[%s220 + $0x570] sm:$0xff]
        %v407 = vld [vmem:[%s220 + $0x578] sm:$0xff]
        %v408 = vld [vmem:[%s220 + $0x580] sm:$0xff]
        %v409 = vld [vmem:[%s220 + $0x588] sm:$0xff]
        %v410 = vld [vmem:[%s220 + $0x590] sm:$0xff]
        %v411 = vld [vmem:[%s220 + $0x598] sm:$0xff]
        %v412 = vld [vmem:[%s220 + $0x5a0] sm:$0xff]
        %v413 = vld [vmem:[%s220 + $0x5a8] sm:$0xff]
        %v414 = vld [vmem:[%s220 + $0x5b0] sm:$0xff]
        %v415 = vld [vmem:[%s220 + $0x5b8] sm:$0xff]
        %v416 = vld [vmem:[%s220 + $0x5c0] sm:$0xff]
        %v417 = vld [vmem:[%s220 + $0x5c8] sm:$0xff]
        %v418 = vld [vmem:[%s220 + $0x5d0] sm:$0xff]
        %v419 = vld [vmem:[%s220 + $0x5d8] sm:$0xff]
        %v420 = vld [vmem:[%s220 + $0x5e0] sm:$0xff]
        %v421 = vld [vmem:[%s220 + $0x5e8] sm:$0xff]
        %v422 = vld [vmem:[%s220 + $0x5f0] sm:$0xff]
        %v423 = vld [vmem:[%s220 + $0x5f8] sm:$0xff]
        %v424 = vld [vmem:[%s220 + $0x600] sm:$0xff]
        %v425 = vld [vmem:[%s220 + $0x608] sm:$0xff]
        %v426 = vld [vmem:[%s220 + $0x610] sm:$0xff]
        %v427 = vld [vmem:[%s220 + $0x618] sm:$0xff]
        %v428 = vld [vmem:[%s220 + $0x620] sm:$0xff]
        %v429 = vld [vmem:[%s220 + $0x628] sm:$0xff]
        %v430 = vld [vmem:[%s220 + $0x630] sm:$0xff]
        %v431 = vld [vmem:[%s220 + $0x638] sm:$0xff]
        %v432 = vld [vmem:[%s220 + $0x640] sm:$0xff]
        %v433 = vld [vmem:[%s220 + $0x648] sm:$0xff]
        %v434 = vld [vmem:[%s220 + $0x650] sm:$0xff]
        %v435 = vld [vmem:[%s220 + $0x658] sm:$0xff]
        %v436 = vld [vmem:[%s220 + $0x660] sm:$0xff]
        %v437 = vld [vmem:[%s220 + $0x668] sm:$0xff]
        %v438 = vld [vmem:[%s220 + $0x670] sm:$0xff]
        %v439 = vld [vmem:[%s220 + $0x678] sm:$0xff]
        %v440 = vld [vmem:[%s220 + $0x680] sm:$0xff]
        %v441 = vld [vmem:[%s220 + $0x688] sm:$0xff]
        %v442 = vld [vmem:[%s220 + $0x690] sm:$0xff]
        %v443 = vld [vmem:[%s220 + $0x698] sm:$0xff]
        %v444 = vld [vmem:[%s220 + $0x6a0] sm:$0xff]
        %v445 = vld [vmem:[%s220 + $0x6a8] sm:$0xff]
        %v446 = vld [vmem:[%s220 + $0x6b0] sm:$0xff]
        %v447 = vld [vmem:[%s220 + $0x6b8] sm:$0xff]
        %v448 = vld [vmem:[%s220 + $0x6c0] sm:$0xff]
        %v449 = vld [vmem:[%s220 + $0x6c8] sm:$0xff]
        %v450 = vld [vmem:[%s220 + $0x6d0] sm:$0xff]
        %v451 = vld [vmem:[%s220 + $0x6d8] sm:$0xff]
        %v452 = vld [vmem:[%s220 + $0x6e0] sm:$0xff]
        %v453 = vld [vmem:[%s220 + $0x6e8] sm:$0xff]
        %v454 = vld [vmem:[%s220 + $0x6f0] sm:$0xff]
        %v455 = vld [vmem:[%s220 + $0x6f8] sm:$0xff]
        %v456 = vld [vmem:[%s220 + $0x700] sm:$0xff]
        %v457 = vld [vmem:[%s220 + $0x708] sm:$0xff]
        %v458 = vld [vmem:[%s220 + $0x710] sm:$0xff]
        %v459 = vld [vmem:[%s220 + $0x718] sm:$0xff]
        %v460 = vld [vmem:[%s220 + $0x720] sm:$0xff]
        %v461 = vld [vmem:[%s220 + $0x728] sm:$0xff]
        %v462 = vld [vmem:[%s220 + $0x730] sm:$0xff]
        %v463 = vld [vmem:[%s220 + $0x738] sm:$0xff]
        %v464 = vld [vmem:[%s220 + $0x740] sm:$0xff]
        %v465 = vld [vmem:[%s220 + $0x748] sm:$0xff]
        %v466 = vld [vmem:[%s220 + $0x750] sm:$0xff]
        %v467 = vld [vmem:[%s220 + $0x758] sm:$0xff]
        %v468 = vld [vmem:[%s220 + $0x760] sm:$0xff]
        %v469 = vld [vmem:[%s220 + $0x768] sm:$0xff]
        %v470 = vld [vmem:[%s220 + $0x770] sm:$0xff]
        %v471 = vld [vmem:[%s220 + $0x778] sm:$0xff]
        %v472 = vld [vmem:[%s220 + $0x780] sm:$0xff]
        %v473 = vld [vmem:[%s220 + $0x788] sm:$0xff]
        %v474 = vld [vmem:[%s220 + $0x790] sm:$0xff]
        %v475 = vld [vmem:[%s220 + $0x798] sm:$0xff]
        %v476 = vld [vmem:[%s220 + $0x7a0] sm:$0xff]
        %v477 = vld [vmem:[%s220 + $0x7a8] sm:$0xff]
        %v478 = vld [vmem:[%s220 + $0x7b0] sm:$0xff]
        %v479 = vld [vmem:[%s220 + $0x7b8] sm:$0xff]
        %v480 = vld [vmem:[%s220 + $0x7c0] sm:$0xff]
        %v481 = vld [vmem:[%s220 + $0x7c8] sm:$0xff]
        %v482 = vld [vmem:[%s220 + $0x7d0] sm:$0xff]
        %v483 = vld [vmem:[%s220 + $0x7d8] sm:$0xff]
        %v484 = vld [vmem:[%s220 + $0x7e0] sm:$0xff]
        %v485 = vld [vmem:[%s220 + $0x7e8] sm:$0xff]
        %v486 = vld [vmem:[%s220 + $0x7f0] sm:$0xff]
        %v487 = vld [vmem:[%s220 + $0x7f8] sm:$0xff]
        %v488 = vld [vmem:[%s225] sm:$0xf]
        %v490 = vlaneseq
        %v491 = vshrl.u32 %v490, 7
        %v492 = vsub.s32 0, %v491
        %v493 = vrot.slane %v488, %v492
        %v494 = vlaneseq
        %v495 = vshrl.u32 %v494, 7
        %v496 = vsub.s32 1, %v495
        %v497 = vrot.slane %v488, %v496
        %v498 = vlaneseq
        %v499 = vshrl.u32 %v498, 7
        %v500 = vsub.s32 2, %v499
        %v501 = vrot.slane %v488, %v500
        %v502 = vlaneseq
        %v503 = vshrl.u32 %v502, 7
        %v504 = vsub.s32 3, %v503
        %v505 = vrot.slane %v488, %v504
        %510 = vmatprep.subr.mxu0 %v233
        %511 = vmatpush1.xpose.msra.mxu0 %v232
        %512 = vmatprep.subr.mxu0 %v237
        %513 = vmatpush1.xpose.msra.mxu0 %v236
        %514 = vmatprep.subr.mxu0 %v241
        %515 = vmatpush1.xpose.msra.mxu0 %v240
        %516 = vmatprep.subr.mxu0 %v245
        %517 = vmatpush1.xpose.msra.mxu0 %v244
        %518 = vmatprep.subr.mxu0 %v249
        %519 = vmatpush1.xpose.msra.mxu0 %v248
        %520 = vmatprep.subr.mxu0 %v253
        %521 = vmatpush1.xpose.msra.mxu0 %v252
        %522 = vmatprep.subr.mxu0 %v257
        %523 = vmatpush1.xpose.msra.mxu0 %v256
        %524 = vmatprep.subr.mxu0 %v261
        %525 = vmatpush1.xpose.msra.mxu0 %v260
        %526 = vmatprep.subr.mxu0 %v265
        %527 = vmatpush1.xpose.msra.mxu0 %v264
        %528 = vmatprep.subr.mxu0 %v269
        %529 = vmatpush1.xpose.msra.mxu0 %v268
        %530 = vmatprep.subr.mxu0 %v273
        %531 = vmatpush1.xpose.msra.mxu0 %v272
        %532 = vmatprep.subr.mxu0 %v277
        %533 = vmatpush1.xpose.msra.mxu0 %v276
        %534 = vmatprep.subr.mxu0 %v281
        %535 = vmatpush1.xpose.msra.mxu0 %v280
        %536 = vmatprep.subr.mxu0 %v285
        %537 = vmatpush1.xpose.msra.mxu0 %v284
        %538 = vmatprep.subr.mxu0 %v289
        %539 = vmatpush1.xpose.msra.mxu0 %v288
        %540 = vmatprep.subr.mxu0 %v293
        %541 = vmatpush1.xpose.msra.mxu0 %v292
        %542 = vmatprep.subr.mxu0 %v297
        %543 = vmatpush1.xpose.msra.mxu0 %v296
        %544 = vmatprep.subr.mxu0 %v301
        %545 = vmatpush1.xpose.msra.mxu0 %v300
        %546 = vmatprep.subr.mxu0 %v305
        %547 = vmatpush1.xpose.msra.mxu0 %v304
        %548 = vmatprep.subr.mxu0 %v309
        %549 = vmatpush1.xpose.msra.mxu0 %v308
        %550 = vmatprep.subr.mxu0 %v313
        %551 = vmatpush1.xpose.msra.mxu0 %v312
        %552 = vmatprep.subr.mxu0 %v317
        %553 = vmatpush1.xpose.msra.mxu0 %v316
        %554 = vmatprep.subr.mxu0 %v321
        %555 = vmatpush1.xpose.msra.mxu0 %v320
        %556 = vmatprep.subr.mxu0 %v325
        %557 = vmatpush1.xpose.msra.mxu0 %v324
        %558 = vmatprep.subr.mxu0 %v329
        %559 = vmatpush1.xpose.msra.mxu0 %v328
        %560 = vmatprep.subr.mxu0 %v333
        %561 = vmatpush1.xpose.msra.mxu0 %v332
        %562 = vmatprep.subr.mxu0 %v337
        %563 = vmatpush1.xpose.msra.mxu0 %v336
        %564 = vmatprep.subr.mxu0 %v341
        %565 = vmatpush1.xpose.msra.mxu0 %v340
        %566 = vmatprep.subr.mxu0 %v345
        %567 = vmatpush1.xpose.msra.mxu0 %v344
        %568 = vmatprep.subr.mxu0 %v349
        %569 = vmatpush1.xpose.msra.mxu0 %v348
        %570 = vmatprep.subr.mxu0 %v353
        %571 = vmatpush1.xpose.msra.mxu0 %v352
        %572 = vmatprep.subr.mxu0 %v357
        %573 = vmatpush1.xpose.msra.mxu0 %v356
        %574 = vmatprep.mubr.f32.mxu0 %v229
        %575 = vmatmul.mubr.f32.gmra.mrb[0].mxu0 %v228
        %v576 = vpop.f32.mrb[0].mxu0
        %v577 = vadd.f32 %v493, %v576
        %v578 = vpop.f32.mrb[0].mxu0
        %v579 = vadd.f32 %v497, %v578
        %580 = vdwg.mxu0
        %581 = vmatprep.subr.mxu0 %v235
        %582 = vmatpush1.xpose.msra.mxu0 %v234
        %583 = vmatprep.subr.mxu0 %v239
        %584 = vmatpush1.xpose.msra.mxu0 %v238
        %585 = vmatprep.subr.mxu0 %v243
        %586 = vmatpush1.xpose.msra.mxu0 %v242
        %587 = vmatprep.subr.mxu0 %v247
        %588 = vmatpush1.xpose.msra.mxu0 %v246
        %589 = vmatprep.subr.mxu0 %v251
        %590 = vmatpush1.xpose.msra.mxu0 %v250
        %591 = vmatprep.subr.mxu0 %v255
        %592 = vmatpush1.xpose.msra.mxu0 %v254
        %593 = vmatprep.subr.mxu0 %v259
        %594 = vmatpush1.xpose.msra.mxu0 %v258
        %595 = vmatprep.subr.mxu0 %v263
        %596 = vmatpush1.xpose.msra.mxu0 %v262
        %597 = vmatprep.subr.mxu0 %v267
        %598 = vmatpush1.xpose.msra.mxu0 %v266
        %599 = vmatprep.subr.mxu0 %v271
        %600 = vmatpush1.xpose.msra.mxu0 %v270
        %601 = vmatprep.subr.mxu0 %v275
        %602 = vmatpush1.xpose.msra.mxu0 %v274
        %603 = vmatprep.subr.mxu0 %v279
        %604 = vmatpush1.xpose.msra.mxu0 %v278
        %605 = vmatprep.subr.mxu0 %v283
        %606 = vmatpush1.xpose.msra.mxu0 %v282
        %607 = vmatprep.subr.mxu0 %v287
        %608 = vmatpush1.xpose.msra.mxu0 %v286
        %609 = vmatprep.subr.mxu0 %v291
        %610 = vmatpush1.xpose.msra.mxu0 %v290
        %611 = vmatprep.subr.mxu0 %v295
        %612 = vmatpush1.xpose.msra.mxu0 %v294
        %613 = vmatprep.subr.mxu0 %v299
        %614 = vmatpush1.xpose.msra.mxu0 %v298
        %615 = vmatprep.subr.mxu0 %v303
        %616 = vmatpush1.xpose.msra.mxu0 %v302
        %617 = vmatprep.subr.mxu0 %v307
        %618 = vmatpush1.xpose.msra.mxu0 %v306
        %619 = vmatprep.subr.mxu0 %v311
        %620 = vmatpush1.xpose.msra.mxu0 %v310
        %621 = vmatprep.subr.mxu0 %v315
        %622 = vmatpush1.xpose.msra.mxu0 %v314
        %623 = vmatprep.subr.mxu0 %v319
        %624 = vmatpush1.xpose.msra.mxu0 %v318
        %625 = vmatprep.subr.mxu0 %v323
        %626 = vmatpush1.xpose.msra.mxu0 %v322
        %627 = vmatprep.subr.mxu0 %v327
        %628 = vmatpush1.xpose.msra.mxu0 %v326
        %629 = vmatprep.subr.mxu0 %v331
        %630 = vmatpush1.xpose.msra.mxu0 %v330
        %631 = vmatprep.subr.mxu0 %v335
        %632 = vmatpush1.xpose.msra.mxu0 %v334
        %633 = vmatprep.subr.mxu0 %v339
        %634 = vmatpush1.xpose.msra.mxu0 %v338
        %635 = vmatprep.subr.mxu0 %v343
        %636 = vmatpush1.xpose.msra.mxu0 %v342
        %637 = vmatprep.subr.mxu0 %v347
        %638 = vmatpush1.xpose.msra.mxu0 %v346
        %639 = vmatprep.subr.mxu0 %v351
        %640 = vmatpush1.xpose.msra.mxu0 %v350
        %641 = vmatprep.subr.mxu0 %v355
        %642 = vmatpush1.xpose.msra.mxu0 %v354
        %643 = vmatprep.subr.mxu0 %v359
        %644 = vmatpush1.xpose.msra.mxu0 %v358
        %645 = vmatprep.mubr.f32.mxu0 %v231
        %646 = vmatmul.mubr.f32.gmra.mrb[0].mxu0 %v230
        %v647 = vpop.f32.mrb[0].mxu0
        %v648 = vadd.f32 %v577, %v647
        %v649 = vpop.f32.mrb[0].mxu0
        %v650 = vadd.f32 %v579, %v649
        %651 = vdwg.mxu0
        %652 = vmatprep.subr.mxu0 %v361
        %653 = vmatpush1.xpose.msra.mxu0 %v360
        %654 = vmatprep.subr.mxu0 %v365
        %655 = vmatpush1.xpose.msra.mxu0 %v364
        %656 = vmatprep.subr.mxu0 %v369
        %657 = vmatpush1.xpose.msra.mxu0 %v368
        %658 = vmatprep.subr.mxu0 %v373
        %659 = vmatpush1.xpose.msra.mxu0 %v372
        %660 = vmatprep.subr.mxu0 %v377
        %661 = vmatpush1.xpose.msra.mxu0 %v376
        %662 = vmatprep.subr.mxu0 %v381
        %663 = vmatpush1.xpose.msra.mxu0 %v380
        %664 = vmatprep.subr.mxu0 %v385
        %665 = vmatpush1.xpose.msra.mxu0 %v384
        %666 = vmatprep.subr.mxu0 %v389
        %667 = vmatpush1.xpose.msra.mxu0 %v388
        %668 = vmatprep.subr.mxu0 %v393
        %669 = vmatpush1.xpose.msra.mxu0 %v392
        %670 = vmatprep.subr.mxu0 %v397
        %671 = vmatpush1.xpose.msra.mxu0 %v396
        %672 = vmatprep.subr.mxu0 %v401
        %673 = vmatpush1.xpose.msra.mxu0 %v400
        %674 = vmatprep.subr.mxu0 %v405
        %675 = vmatpush1.xpose.msra.mxu0 %v404
        %676 = vmatprep.subr.mxu0 %v409
        %677 = vmatpush1.xpose.msra.mxu0 %v408
        %678 = vmatprep.subr.mxu0 %v413
        %679 = vmatpush1.xpose.msra.mxu0 %v412
        %680 = vmatprep.subr.mxu0 %v417
        %681 = vmatpush1.xpose.msra.mxu0 %v416
        %682 = vmatprep.subr.mxu0 %v421
        %683 = vmatpush1.xpose.msra.mxu0 %v420
        %684 = vmatprep.subr.mxu0 %v425
        %685 = vmatpush1.xpose.msra.mxu0 %v424
        %686 = vmatprep.subr.mxu0 %v429
        %687 = vmatpush1.xpose.msra.mxu0 %v428
        %688 = vmatprep.subr.mxu0 %v433
        %689 = vmatpush1.xpose.msra.mxu0 %v432
        %690 = vmatprep.subr.mxu0 %v437
        %691 = vmatpush1.xpose.msra.mxu0 %v436
        %692 = vmatprep.subr.mxu0 %v441
        %693 = vmatpush1.xpose.msra.mxu0 %v440
        %694 = vmatprep.subr.mxu0 %v445
        %695 = vmatpush1.xpose.msra.mxu0 %v444
        %696 = vmatprep.subr.mxu0 %v449
        %697 = vmatpush1.xpose.msra.mxu0 %v448
        %698 = vmatprep.subr.mxu0 %v453
        %699 = vmatpush1.xpose.msra.mxu0 %v452
        %700 = vmatprep.subr.mxu0 %v457
        %701 = vmatpush1.xpose.msra.mxu0 %v456
        %702 = vmatprep.subr.mxu0 %v461
        %703 = vmatpush1.xpose.msra.mxu0 %v460
        %704 = vmatprep.subr.mxu0 %v465
        %705 = vmatpush1.xpose.msra.mxu0 %v464
        %706 = vmatprep.subr.mxu0 %v469
        %707 = vmatpush1.xpose.msra.mxu0 %v468
        %708 = vmatprep.subr.mxu0 %v473
        %709 = vmatpush1.xpose.msra.mxu0 %v472
        %710 = vmatprep.subr.mxu0 %v477
        %711 = vmatpush1.xpose.msra.mxu0 %v476
        %712 = vmatprep.subr.mxu0 %v481
        %713 = vmatpush1.xpose.msra.mxu0 %v480
        %714 = vmatprep.subr.mxu0 %v485
        %715 = vmatpush1.xpose.msra.mxu0 %v484
        %716 = vmatprep.mubr.f32.mxu0 %v229
        %717 = vmatmul.mubr.f32.gmra.mrb[0].mxu0 %v228
        %v718 = vpop.f32.mrb[0].mxu0
        %v719 = vadd.f32 %v501, %v718
        %v720 = vpop.f32.mrb[0].mxu0
        %v721 = vadd.f32 %v505, %v720
        %722 = vdwg.mxu0
        %723 = vmatprep.subr.mxu0 %v363
        %724 = vmatpush1.xpose.msra.mxu0 %v362
        %725 = vmatprep.subr.mxu0 %v367
        %726 = vmatpush1.xpose.msra.mxu0 %v366
        %727 = vmatprep.subr.mxu0 %v371
        %728 = vmatpush1.xpose.msra.mxu0 %v370
        %729 = vmatprep.subr.mxu0 %v375
        %730 = vmatpush1.xpose.msra.mxu0 %v374
        %731 = vmatprep.subr.mxu0 %v379
        %732 = vmatpush1.xpose.msra.mxu0 %v378
        %733 = vmatprep.subr.mxu0 %v383
        %734 = vmatpush1.xpose.msra.mxu0 %v382
        %735 = vmatprep.subr.mxu0 %v387
        %736 = vmatpush1.xpose.msra.mxu0 %v386
        %737 = vmatprep.subr.mxu0 %v391
        %738 = vmatpush1.xpose.msra.mxu0 %v390
        %739 = vmatprep.subr.mxu0 %v395
        %740 = vmatpush1.xpose.msra.mxu0 %v394
        %741 = vmatprep.subr.mxu0 %v399
        %742 = vmatpush1.xpose.msra.mxu0 %v398
        %743 = vmatprep.subr.mxu0 %v403
        %744 = vmatpush1.xpose.msra.mxu0 %v402
        %745 = vmatprep.subr.mxu0 %v407
        %746 = vmatpush1.xpose.msra.mxu0 %v406
        %747 = vmatprep.subr.mxu0 %v411
        %748 = vmatpush1.xpose.msra.mxu0 %v410
        %749 = vmatprep.subr.mxu0 %v415
        %750 = vmatpush1.xpose.msra.mxu0 %v414
        %751 = vmatprep.subr.mxu0 %v419
        %752 = vmatpush1.xpose.msra.mxu0 %v418
        %753 = vmatprep.subr.mxu0 %v423
        %754 = vmatpush1.xpose.msra.mxu0 %v422
        %755 = vmatprep.subr.mxu0 %v427
        %756 = vmatpush1.xpose.msra.mxu0 %v426
        %757 = vmatprep.subr.mxu0 %v431
        %758 = vmatpush1.xpose.msra.mxu0 %v430
        %759 = vmatprep.subr.mxu0 %v435
        %760 = vmatpush1.xpose.msra.mxu0 %v434
        %761 = vmatprep.subr.mxu0 %v439
        %762 = vmatpush1.xpose.msra.mxu0 %v438
        %763 = vmatprep.subr.mxu0 %v443
        %764 = vmatpush1.xpose.msra.mxu0 %v442
        %765 = vmatprep.subr.mxu0 %v447
        %766 = vmatpush1.xpose.msra.mxu0 %v446
        %767 = vmatprep.subr.mxu0 %v451
        %768 = vmatpush1.xpose.msra.mxu0 %v450
        %769 = vmatprep.subr.mxu0 %v455
        %770 = vmatpush1.xpose.msra.mxu0 %v454
        %771 = vmatprep.subr.mxu0 %v459
        %772 = vmatpush1.xpose.msra.mxu0 %v458
        %773 = vmatprep.subr.mxu0 %v463
        %774 = vmatpush1.xpose.msra.mxu0 %v462
        %775 = vmatprep.subr.mxu0 %v467
        %776 = vmatpush1.xpose.msra.mxu0 %v466
        %777 = vmatprep.subr.mxu0 %v471
        %778 = vmatpush1.xpose.msra.mxu0 %v470
        %779 = vmatprep.subr.mxu0 %v475
        %780 = vmatpush1.xpose.msra.mxu0 %v474
        %781 = vmatprep.subr.mxu0 %v479
        %782 = vmatpush1.xpose.msra.mxu0 %v478
        %783 = vmatprep.subr.mxu0 %v483
        %784 = vmatpush1.xpose.msra.mxu0 %v482
        %785 = vmatprep.subr.mxu0 %v487
        %786 = vmatpush1.xpose.msra.mxu0 %v486
        %787 = vmatprep.mubr.f32.mxu0 %v231
        %788 = vmatmul.mubr.f32.gmra.mrb[0].mxu0 %v230
        %v789 = vpop.f32.mrb[0].mxu0
        %v790 = vadd.f32 %v719, %v789
        %v791 = vpop.f32.mrb[0].mxu0
        %v792 = vadd.f32 %v721, %v791
        %793 = vdwg.mxu0
        %794 = vst [vmem:[%s209] sm:$0xff] %v648
        %795 = vst [vmem:[%s209 + $0x8] sm:$0xff] %v650
        %796 = vst [vmem:[%s209 + $0x10] sm:$0xff] %v790
        %797 = vst [vmem:[%s209 + $0x18] sm:$0xff] %v792
        %s798 = sand.u32 %s117, 1
        %s799 = scalar_lea.sflag [#allocation3], %s798
        %s800 = sand.u32 %s117, 1
        %s801 = smul.addr %s800, 32
        %s802 = scalar_lea.vmem [#allocation2], %s801
        // Predicated region
        $region33: #{resnet_top_no_softmax.1} parent=31 // pred_check
          %p803 = pneg %p127
        $region34: #{resnet_top_no_softmax.1} parent=31 // pred_check_branch
          %805 = sbr.rel (%p803) target = $region36
        $region35: #{resnet_top_no_softmax.1} parent=31 // pred_region
          %s806 = smul.u32 4, %s22
          %s808 = ssub.s32 512, 512
          %809 = vsyncadd %s799, %s808
          %s810 = smul.addr %s21, 8
          %s811 = sadd.s32 %s806, %s810
          %s812 = smul.addr %s811, 128
          %s813 = scalar_lea.hbm %s3, %s812
          %s815 = sshll.u32 %s802, 4
          %s816 = int_to_ptr.vmem [resolvable:$true] %s815
          %818 = dma.vmem_to_hbm [thread:$0]  %s816, 512, %s813, %s799
        $region36: #{resnet_top_no_softmax.1} parent=31 // pred_fallthru
          _
      $region32: #{resnet_top_no_softmax.1} parent=5 // pred_fallthru
        _
      %p819 = scmp.le.s32.totalorder 2, %s12
      // Predicated region
      $region37: #{resnet_top_no_softmax.1} parent=5 // pred_check
        %p820 = pneg %p819
      $region38: #{resnet_top_no_softmax.1} parent=5 // pred_check_branch
        %822 = sbr.rel (%p820) target = $region40
      $region39: #{resnet_top_no_softmax.1} parent=5 // pred_region
        %s823 = ssub.s32 %s12, 2
        // Predicated region
        $region41: #{resnet_top_no_softmax.1} parent=39 // pred_check
          %p824 = pneg %p133
        $region42: #{resnet_top_no_softmax.1} parent=39 // pred_check_branch
          %826 = sbr.rel (%p824) target = $region44
        $region43: #{resnet_top_no_softmax.1} parent=39 // pred_region
          %s827 = sand.u32 %s118, 1
          %s828 = scalar_lea.sflag [#allocation3], %s827
          %s829 = sand.u32 %s118, 1
          %s830 = smul.addr %s829, 32
          %s831 = scalar_lea.vmem [#allocation2], %s830
          %832 = dma.done %s828, 512
        $region44: #{resnet_top_no_softmax.1} parent=39 // pred_fallthru
          _
      $region40: #{resnet_top_no_softmax.1} parent=5 // pred_fallthru
        _
    $region6: #{resnet_top_no_softmax.1} parent=1 // loop_footer
      %s16 = sadd.s32 1, %s12
    $region7: #{resnet_top_no_softmax.1} parent=1 // loop_footer_branch
      %11 = sbr.rel target = $region3
    $region8: #{resnet_top_no_softmax.1} parent=1 // loop_exit
      _
    %833 = vsyncpa [#allocation3], 1
    %s834 = scalar_lea.sflag [#allocation3], 1
    %835 = vsyncpa %s834, 1

</llo_original>
